<compile_context>
chip_gen: v6e
topology: v6e:2x2x1
jax: 0.10.0
libtpu: 0.0.40
codegen_flags: <defaults>
</compile_context>

<pallas_src>
import functools

import jax
import jax.numpy as jnp
from jax.experimental import pallas as pl
from jax.experimental.pallas import tpu as pltpu


def facegrid_kernel(x_ref, w1_ref, b1_ref, w2_ref, b2_ref, o_ref):
    # Layer 1: bf16 MXU matmul with f32 accumulation; bias + ReLU in f32.
    h = jnp.dot(x_ref[...], w1_ref[...], preferred_element_type=jnp.float32)
    h = jnp.maximum(h + b1_ref[...], 0.0)
    # Layer 2: cast the activation back to bf16 for the MXU, accumulate in f32.
    y = jnp.dot(h.astype(w2_ref.dtype), w2_ref[...],
                preferred_element_type=jnp.float32)
    y = jnp.maximum(y + b2_ref[...], 0.0)
    o_ref[...] = y.astype(o_ref.dtype)


def _round_up(n, m):
    return ((n + m - 1) // m) * m


# Max batch tile.  VMEM at tb=2048: x 2.5 MiB x2 bufs + out 1 MiB x2 bufs +
# weights ~0.4 MiB x2 + ~2 MiB f32 intermediate ~= 10 MiB -> fits even v5e's
# 16 MiB default scoped-VMEM limit (v6e/v7x default 32 MiB).
_TB_MAX = 2048


@functools.partial(jax.jit, static_argnames=("tb", "out_dtype"))
def facegrid_forward(x, w1, b1, w2, b2, *, tb=None, out_dtype=jnp.float32):
    """x: (B, 25, 25) or (B, 625) float32.  Returns (B, 128) `out_dtype`."""
    x2d = x.reshape(x.shape[0], -1)                        # flatten(start_dim=1)
    B, D_in = x2d.shape
    D_h = w1.shape[1]                                      # 256
    D_out = w2.shape[1]                                    # 128
    assert w1.shape[0] == D_in and w2.shape[0] == D_h

    # Batch tile selection:
    #  * large B: 1024-2048-row tiles to amortize per-step overhead, but keep
    #    >= 2 grid steps so v7x's two TensorCores both get sharded work.
    #  * small B: one tile, rounded up to 16 rows (bf16 sublane packing).
    if tb is None:
        if B <= 512:
            tb = max(16, _round_up(B, 16))
        else:
            tb = min(_TB_MAX, _round_up(pl.cdiv(B, 2), 256))
    B_pad = _round_up(B, tb)

    # Pad the contraction dim to a clean multiple of 128 lanes (625 -> 640).
    # Do NOT pad further: the kernel is HBM-bound, extra bytes are a net loss.
    K = _round_up(D_in, 128)

    # Activation convert + pad.  With allow_input_fusion on operand 0, XLA can
    # fuse this into the kernel's input instead of round-tripping a padded
    # bf16 copy of x through HBM.
    x_bf = jnp.pad(x2d.astype(jnp.bfloat16), ((0, B_pad - B), (0, K - D_in)))

    # bf16 matmul weights (native MXU dtype, halves weight DMA), f32 biases.
    w1_bf = jnp.pad(w1.astype(jnp.bfloat16), ((0, K - D_in), (0, 0)))
    w2_bf = w2.astype(jnp.bfloat16)
    b1_f = b1.reshape(1, D_h).astype(jnp.float32)
    b2_f = b2.reshape(1, D_out).astype(jnp.float32)

    grid = (B_pad // tb,)
    flops = 2 * B_pad * (K * D_h + D_h * D_out)
    bytes_accessed = (B_pad * K * 2 + w1_bf.size * 2 + w2_bf.size * 2
                      + b1_f.size * 4 + b2_f.size * 4
                      + B_pad * D_out * jnp.dtype(out_dtype).itemsize)

    out = pl.pallas_call(
        facegrid_kernel,
        out_shape=jax.ShapeDtypeStruct((B_pad, D_out), out_dtype),
        grid=grid,
        in_specs=[
            # Activations: tiled over the batch grid axis.
            pl.BlockSpec((tb, K), lambda i: (i, 0)),
            # Weights / biases: constant block index -> DMA'd once, then stay
            # VMEM-resident across all grid steps.
            # TODO(synk): pipeline_mode=pl.Buffered(1) would halve their tiny
            # (~0.4 MiB) double-buffer footprint; left at default for lowering
            # compatibility.
            pl.BlockSpec((K, D_h), lambda i: (0, 0)),
            pl.BlockSpec((1, D_h), lambda i: (0, 0)),
            pl.BlockSpec((D_h, D_out), lambda i: (0, 0)),
            pl.BlockSpec((1, D_out), lambda i: (0, 0)),
        ],
        out_specs=pl.BlockSpec((tb, D_out), lambda i: (i, 0)),
        compiler_params=pltpu.CompilerParams(
            dimension_semantics=("parallel",),
            vmem_limit_bytes=32 * 1024 * 1024,
            allow_input_fusion=[True, False, False, False, False],
        ),
        cost_estimate=pl.CostEstimate(
            flops=flops, transcendentals=0, bytes_accessed=bytes_accessed),
    )(x_bf, w1_bf, b1_f, w2_bf, b2_f)

    return out[:B]


def init_params(key):
    """Deterministic synthetic parameters matching nn.Linear(625,256)/(256,128)."""
    k1, k2, k3, k4 = jax.random.split(key, 4)
    # PyTorch Linear stores weight as (out, in); we keep (in, out) for the kernel.
    bound1 = 1.0 / jnp.sqrt(625.0)
    w1 = jax.random.uniform(k1, (625, 256), jnp.float32, -bound1, bound1)
    b1 = jax.random.uniform(k2, (1, 256), jnp.float32, -bound1, bound1)
    bound2 = 1.0 / jnp.sqrt(256.0)
    w2 = jax.random.uniform(k3, (256, 128), jnp.float32, -bound2, bound2)
    b2 = jax.random.uniform(k4, (1, 128), jnp.float32, -bound2, bound2)
    return w1, b1, w2, b2


if __name__ == "__main__":
    key = jax.random.PRNGKey(0)
    k_x, k_p, k_x2 = jax.random.split(key, 3)

    w1, b1, w2, b2 = init_params(k_p)

    def ref_f32(x2d):
        h = jnp.maximum(x2d @ w1 + b1, 0.0)
        return jnp.maximum(h @ w2 + b2, 0.0)

    def ref_bf16(x2d):
        # Same bf16-rounded operands, f32 accumulation -> apples-to-apples
        # with the kernel's bf16-input / f32-accumulate matmuls.
        xb = x2d.astype(jnp.bfloat16).astype(jnp.float32)
        w1b = w1.astype(jnp.bfloat16).astype(jnp.float32)
        w2b = w2.astype(jnp.bfloat16).astype(jnp.float32)
        h = jnp.maximum(xb @ w1b + b1, 0.0)
        return jnp.maximum(
            h.astype(jnp.bfloat16).astype(jnp.float32) @ w2b + b2, 0.0)

    # Case 1: tiny batch -> single 16-row tile path.
    B = 8
    x = jax.random.normal(k_x, (B, 25, 25), jnp.float32)   # 25x25 face grid
    out = jax.block_until_ready(facegrid_forward(x, w1, b1, w2, b2))
    assert out.shape == (B, 128)
    x2d = x.reshape(B, -1)
    assert jnp.allclose(out, ref_bf16(x2d), atol=1e-3, rtol=1e-3)
    assert jnp.allclose(out, ref_f32(x2d), atol=5e-2, rtol=5e-2)

    # Case 2: larger batch -> multi-step grid (tb=512, 2 steps), padded rows
    # produced and sliced off.
    B2 = 600
    x2 = jax.random.normal(k_x2, (B2, 625), jnp.float32)
    out2 = jax.block_until_ready(facegrid_forward(x2, w1, b1, w2, b2))
    assert out2.shape == (B2, 128)
    assert jnp.allclose(out2, ref_bf16(x2), atol=1e-3, rtol=1e-3)
    assert jnp.allclose(out2, ref_f32(x2), atol=5e-2, rtol=5e-2)

    print("KERNEL_OK")
</pallas_src>

<mosaic_0001>
module attributes {stable_mosaic.version = 11 : i64} {
  func.func @facegrid_kernel(%arg0: i32, %arg1: memref<16x640xbf16, #tpu.memory_space<vmem>>, %arg2: memref<640x256xbf16, #tpu.memory_space<vmem>>, %arg3: memref<1x256xf32, #tpu.memory_space<vmem>>, %arg4: memref<256x128xbf16, #tpu.memory_space<vmem>>, %arg5: memref<1x128xf32, #tpu.memory_space<vmem>>, %arg6: memref<16x128xf32, #tpu.memory_space<vmem>>) attributes {dimension_semantics = [#tpu.dimension_semantics<parallel>], iteration_bounds = array<i64: 1>, scalar_prefetch = 0 : i64, scratch_operands = 0 : i64, tpu.core_type = #tpu.core_type<tc>, window_params = [{transform_indices = @transform_0, window_bounds = array<i64: 16, 640>}, {pipeline_mode = #tpu.pipeline_mode<synchronous>, transform_indices = @transform_1, window_bounds = array<i64: 640, 256>}, {pipeline_mode = #tpu.pipeline_mode<synchronous>, transform_indices = @transform_2, window_bounds = array<i64: 1, 256>}, {pipeline_mode = #tpu.pipeline_mode<synchronous>, transform_indices = @transform_3, window_bounds = array<i64: 256, 128>}, {pipeline_mode = #tpu.pipeline_mode<synchronous>, transform_indices = @transform_4, window_bounds = array<i64: 1, 128>}, {transform_indices = @transform_5, window_bounds = array<i64: 16, 128>}]} {
    %c0 = arith.constant 0 : index
    %c0_0 = arith.constant 0 : index
    %0 = vector.load %arg1[%c0, %c0_0] : memref<16x640xbf16, #tpu.memory_space<vmem>>, vector<16x640xbf16>
    %c0_1 = arith.constant 0 : index
    %c0_2 = arith.constant 0 : index
    %1 = vector.load %arg2[%c0_1, %c0_2] : memref<640x256xbf16, #tpu.memory_space<vmem>>, vector<640x256xbf16>
    %cst = arith.constant dense<0.000000e+00> : vector<16x256xf32>
    %2 = tpu.matmul %0, %1, %cst {dimension_numbers = #tpu.dot_dimension_numbers<[1], [0], [0], [1], [0, 0, 1, 1], [], []>} : vector<16x640xbf16>, vector<640x256xbf16>, vector<16x256xf32> -> vector<16x256xf32>
    %c0_3 = arith.constant 0 : index
    %c0_4 = arith.constant 0 : index
    %3 = vector.load %arg3[%c0_3, %c0_4] : memref<1x256xf32, #tpu.memory_space<vmem>>, vector<1x256xf32>
    %4 = vector.broadcast %3 : vector<1x256xf32> to vector<16x256xf32>
    %5 = arith.addf %2, %4 : vector<16x256xf32>
    %cst_5 = arith.constant 0.000000e+00 : f32
    %6 = vector.broadcast %cst_5 : f32 to vector<16x256xf32>
    %7 = arith.maximumf %5, %6 : vector<16x256xf32>
    %8 = arith.truncf %7 : vector<16x256xf32> to vector<16x256xbf16>
    %c0_6 = arith.constant 0 : index
    %c0_7 = arith.constant 0 : index
    %9 = vector.load %arg4[%c0_6, %c0_7] : memref<256x128xbf16, #tpu.memory_space<vmem>>, vector<256x128xbf16>
    %cst_8 = arith.constant dense<0.000000e+00> : vector<16x128xf32>
    %10 = tpu.matmul %8, %9, %cst_8 {dimension_numbers = #tpu.dot_dimension_numbers<[1], [0], [0], [1], [0, 0, 1, 1], [], []>} : vector<16x256xbf16>, vector<256x128xbf16>, vector<16x128xf32> -> vector<16x128xf32>
    %c0_9 = arith.constant 0 : index
    %c0_10 = arith.constant 0 : index
    %11 = vector.load %arg5[%c0_9, %c0_10] : memref<1x128xf32, #tpu.memory_space<vmem>>, vector<1x128xf32>
    %12 = vector.broadcast %11 : vector<1x128xf32> to vector<16x128xf32>
    %13 = arith.addf %10, %12 : vector<16x128xf32>
    %cst_11 = arith.constant 0.000000e+00 : f32
    %14 = vector.broadcast %cst_11 : f32 to vector<16x128xf32>
    %15 = arith.maximumf %13, %14 : vector<16x128xf32>
    %c0_12 = arith.constant 0 : index
    %c0_13 = arith.constant 0 : index
    %16 = vector.load %arg6[%c0_12, %c0_13] : memref<16x128xf32, #tpu.memory_space<vmem>>, vector<16x128xf32>
    tpu.vector_store %arg6[%c0_12, %c0_13], %15 {strides = array<i32>} : memref<16x128xf32, #tpu.memory_space<vmem>>, vector<16x128xf32>,
    return
  }
  func.func @transform_0(%arg0: i32) -> (i32, i32) {
    %c0_i32 = arith.constant 0 : i32
    %c0_i32_0 = arith.constant 0 : i32
    return %arg0, %c0_i32 : i32, i32
  }
  func.func @transform_1(%arg0: i32) -> (i32, i32) {
    %c0_i32 = arith.constant 0 : i32
    %c0_i32_0 = arith.constant 0 : i32
    %c0_i32_1 = arith.constant 0 : i32
    return %c0_i32, %c0_i32_0 : i32, i32
  }
  func.func @transform_2(%arg0: i32) -> (i32, i32) {
    %c0_i32 = arith.constant 0 : i32
    %c0_i32_0 = arith.constant 0 : i32
    %c0_i32_1 = arith.constant 0 : i32
    return %c0_i32, %c0_i32_0 : i32, i32
  }
  func.func @transform_3(%arg0: i32) -> (i32, i32) {
    %c0_i32 = arith.constant 0 : i32
    %c0_i32_0 = arith.constant 0 : i32
    %c0_i32_1 = arith.constant 0 : i32
    return %c0_i32, %c0_i32_0 : i32, i32
  }
  func.func @transform_4(%arg0: i32) -> (i32, i32) {
    %c0_i32 = arith.constant 0 : i32
    %c0_i32_0 = arith.constant 0 : i32
    %c0_i32_1 = arith.constant 0 : i32
    return %c0_i32, %c0_i32_0 : i32, i32
  }
  func.func @transform_5(%arg0: i32) -> (i32, i32) {
    %c0_i32 = arith.constant 0 : i32
    %c0_i32_0 = arith.constant 0 : i32
    return %arg0, %c0_i32 : i32, i32
  }
}

</mosaic_0001>

<llo_original>
// kernel: facegrid_forward.2
$region0: #{facegrid_forward.2}
  #allocation0 [shape = 'u32[]', space=smem, size = 0x4, offset = 0x4, fixed_abs, tag = 'smem constant byte address 0x4 - core index']
  #allocation1 [shape = 'u32[144,128]{1,0:T(1,128)}', space=vmem, size = 0x12000, scoped, tag = 'internal scratch']
  #allocation2 [shape = 'u32[2048]{0}', space=vmem, size = 0x2000, scoped, tag = 'scoped memory for facegrid_forward.2']
  #allocation3 [shape = 'u32[2048]{0}', space=vmem, size = 0x2000, scoped, tag = 'scoped memory for facegrid_forward.2']
  #allocation4 [shape = 'u32[2048]{0}', space=vmem, size = 0x2000, scoped, tag = 'scoped memory for facegrid_forward.2']
  #allocation5 [shape = 'u32[2048]{0}', space=vmem, size = 0x2000, scoped, tag = 'scoped memory for facegrid_forward.2']
  #allocation6 [shape = 'u32[2048]{0}', space=vmem, size = 0x2000, scoped, tag = 'scoped memory for facegrid_forward.2']
  %s0 = inlined_call_operand.vmem [shape: bf16[640,256], index: 0, kind: input, shape index: {}]
  %s1 = inlined_call_operand.vmem [shape: f32[1,256], index: 1, kind: input, shape index: {}]
  %s2 = inlined_call_operand.vmem [shape: bf16[256,128], index: 2, kind: input, shape index: {}]
  %s3 = inlined_call_operand.vmem [shape: f32[1,128], index: 3, kind: input, shape index: {}]
  %s4 = inlined_call_operand.vmem [shape: bf16[8,625], index: 4, kind: input, shape index: {}]
  %s5 = inlined_call_operand.<no memory space> [shape: bf16[], index: 5, kind: input, shape index: {}]
  %s6 = inlined_call_operand.vmem [shape: f32[16,128], index: 6, kind: output, shape index: {}]
  %s7 = sld [smem:[#allocation0]]
  $region30: #{facegrid_forward.2} parent=0
    _
  %s9 = ssub.s32 1, %s7
  %s10 = scalar_select 0, %s9, %s7
  %v11 = vstv %s5
  %v12 = vunpack.i.l.bf16 %v11
  %v14 = vunpack.i.h.bf16 %v11
  $region1: #{facegrid_forward.2} parent=0
    #allocation7 [shape = 'u8[20480]{0}', space=vmem, size = 0x5000, dematerialized = true, scoped, tag = 'FusionAdapter Buffer %fusion.1 = bf16[16,640]{1,0:T(8,128)(2,1)} fusion(%param_4.1, %param_5), kind=kLoop, calls=%fused_computation.1.clone, metadata={op_name="jit(facegrid_forward)/jit(_pad)/pad" stack_frame_id=9}']
    // Predicated region
    $region2: #{facegrid_forward.2} parent=1 // pred_check
      _
    $region3: #{facegrid_forward.2} parent=1 // pred_check_branch
      %17 = sbr.rel (0) target = $region5
    $region4: #{facegrid_forward.2} parent=1 // pred_region
      _
    $region5: #{facegrid_forward.2} parent=1 // pred_fallthru
      _
    // Predicated region
    $region6: #{facegrid_forward.2} parent=1 // pred_check
      _
    $region7: #{facegrid_forward.2} parent=1 // pred_check_branch
      %19 = sbr.rel (0) target = $region9
    $region8: #{facegrid_forward.2} parent=1 // pred_region
      _
    $region9: #{facegrid_forward.2} parent=1 // pred_fallthru
      _
    // Predicated region
    $region10: #{facegrid_forward.2} parent=1 // pred_check
      _
    $region11: #{facegrid_forward.2} parent=1 // pred_check_branch
      %21 = sbr.rel (0) target = $region13
    $region12: #{facegrid_forward.2} parent=1 // pred_region
      _
    $region13: #{facegrid_forward.2} parent=1 // pred_fallthru
      _
    // Predicated region
    $region14: #{facegrid_forward.2} parent=1 // pred_check
      _
    $region15: #{facegrid_forward.2} parent=1 // pred_check_branch
      %23 = sbr.rel (0) target = $region17
    $region16: #{facegrid_forward.2} parent=1 // pred_region
      _
    $region17: #{facegrid_forward.2} parent=1 // pred_fallthru
      _
    // Predicated region
    $region18: #{facegrid_forward.2} parent=1 // pred_check
      _
    $region19: #{facegrid_forward.2} parent=1 // pred_check_branch
      %25 = sbr.rel (0) target = $region21
    $region20: #{facegrid_forward.2} parent=1 // pred_region
      _
    $region21: #{facegrid_forward.2} parent=1 // pred_fallthru
      _
    %s27 = sor.u32 255, 127
    %s28 = sand.u32 %s27, 85
    %s29 = sshrl.u32 %s28, 1
    %s30 = sor.u32 %s28, %s29
    %s31 = sand.u32 51, %s30
    %s32 = sshrl.u32 %s31, 2
    %s33 = sor.u32 %s31, %s32
    %s34 = sand.u32 15, %s33
    %v35 = vld [vmem:[%s4] sm:%s34]
    %v36 = vunpack.c.l.bf16 %v35
    %v37 = vunpack.c.h.bf16 %v35
    %v38 = vlaneseq
    %v39 = vand.u32 %v38, 127
    %vm41 = vcmp.lt.s32.totalorder %v39, 625
    %v42 = vsel %vm41, %v36, %v12
    %v43 = vpack.c.bf16 0.0, %v42
    %s45 = ssub.s32 16, 1
    %46 = vst [vmem:[#allocation7] sm:%s45] %v43
    %s47 = scalar_lea.vmem %s4, 4
    %s49 = sor.u32 255, 127
    %s50 = sand.u32 %s49, 85
    %s51 = sshrl.u32 %s50, 1
    %s52 = sor.u32 %s50, %s51
    %s53 = sand.u32 51, %s52
    %s54 = sshrl.u32 %s53, 2
    %s55 = sor.u32 %s53, %s54
    %s56 = sand.u32 15, %s55
    %v57 = vld [vmem:[%s47] sm:%s56]
    %v58 = vunpack.c.l.bf16 %v57
    %v59 = vunpack.c.h.bf16 %v57
    %v60 = vlaneseq
    %v61 = vand.u32 %v60, 127
    %v62 = vadd.s32 %v61, 128
    %vm63 = vcmp.lt.s32.totalorder %v62, 625
    %v64 = vsel %vm63, %v58, %v12
    %s65 = scalar_lea.vmem [#allocation7], 4
    %v66 = vpack.c.bf16 0.0, %v64
    %s68 = ssub.s32 16, 1
    %69 = vst [vmem:[%s65] sm:%s68] %v66
    %s70 = scalar_lea.vmem %s4, 8
    %s72 = sor.u32 255, 127
    %s73 = sand.u32 %s72, 85
    %s74 = sshrl.u32 %s73, 1
    %s75 = sor.u32 %s73, %s74
    %s76 = sand.u32 51, %s75
    %s77 = sshrl.u32 %s76, 2
    %s78 = sor.u32 %s76, %s77
    %s79 = sand.u32 15, %s78
    %v80 = vld [vmem:[%s70] sm:%s79]
    %v81 = vunpack.c.l.bf16 %v80
    %v82 = vunpack.c.h.bf16 %v80
    %v83 = vlaneseq
    %v84 = vand.u32 %v83, 127
    %v85 = vadd.s32 %v84, 256
    %vm86 = vcmp.lt.s32.totalorder %v85, 625
    %v87 = vsel %vm86, %v81, %v12
    %s88 = scalar_lea.vmem [#allocation7], 8
    %v89 = vpack.c.bf16 0.0, %v87
    %s91 = ssub.s32 16, 1
    %92 = vst [vmem:[%s88] sm:%s91] %v89
    %s93 = scalar_lea.vmem %s4, 12
    %s95 = sor.u32 255, 127
    %s96 = sand.u32 %s95, 85
    %s97 = sshrl.u32 %s96, 1
    %s98 = sor.u32 %s96, %s97
    %s99 = sand.u32 51, %s98
    %s100 = sshrl.u32 %s99, 2
    %s101 = sor.u32 %s99, %s100
    %s102 = sand.u32 15, %s101
    %v103 = vld [vmem:[%s93] sm:%s102]
    %v104 = vunpack.c.l.bf16 %v103
    %v105 = vunpack.c.h.bf16 %v103
    %v106 = vlaneseq
    %v107 = vand.u32 %v106, 127
    %v108 = vadd.s32 %v107, 384
    %vm109 = vcmp.lt.s32.totalorder %v108, 625
    %v110 = vsel %vm109, %v104, %v12
    %s111 = scalar_lea.vmem [#allocation7], 12
    %v112 = vpack.c.bf16 0.0, %v110
    %s114 = ssub.s32 16, 1
    %115 = vst [vmem:[%s111] sm:%s114] %v112
    %s116 = scalar_lea.vmem %s4, 16
    %s118 = sor.u32 255, 127
    %s119 = sand.u32 %s118, 85
    %s120 = sshrl.u32 %s119, 1
    %s121 = sor.u32 %s119, %s120
    %s122 = sand.u32 51, %s121
    %s123 = sshrl.u32 %s122, 2
    %s124 = sor.u32 %s122, %s123
    %s125 = sand.u32 15, %s124
    %v126 = vld [vmem:[%s116] sm:%s125]
    %v127 = vunpack.c.l.bf16 %v126
    %v128 = vunpack.c.h.bf16 %v126
    %v129 = vlaneseq
    %v130 = vand.u32 %v129, 127
    %v131 = vadd.s32 %v130, 512
    %vm132 = vcmp.lt.s32.totalorder %v131, 625
    %v133 = vsel %vm132, %v127, %v12
    %s134 = scalar_lea.vmem [#allocation7], 16
    %v135 = vpack.c.bf16 0.0, %v133
    %s137 = ssub.s32 16, 1
    %138 = vst [vmem:[%s134] sm:%s137] %v135
    %s139 = scalar_lea.vmem [#allocation7], 20
    %v140 = vpack.c.bf16 0.0, %v12
    %s142 = ssub.s32 16, 1
    %143 = vst [vmem:[%s139] sm:%s142] %v140
    %s144 = scalar_lea.vmem [#allocation7], 24
    %v145 = vpack.c.bf16 0.0, %v12
    %s147 = ssub.s32 16, 1
    %148 = vst [vmem:[%s144] sm:%s147] %v145
    %s149 = scalar_lea.vmem [#allocation7], 28
    %v150 = vpack.c.bf16 0.0, %v12
    %s152 = ssub.s32 16, 1
    %153 = vst [vmem:[%s149] sm:%s152] %v150
    %s154 = scalar_lea.vmem [#allocation7], 32
    %v155 = vpack.c.bf16 0.0, %v12
    %s157 = ssub.s32 16, 1
    %158 = vst [vmem:[%s154] sm:%s157] %v155
    %s159 = scalar_lea.vmem [#allocation7], 36
    %v160 = vpack.c.bf16 0.0, %v12
    %s162 = ssub.s32 16, 1
    %163 = vst [vmem:[%s159] sm:%s162] %v160
    %v165 = vld [vmem:[#allocation7] sm:$0xff]
    %v166 = vld [vmem:[#allocation7 + $0x8] sm:$0xff]
    %v167 = vld [vmem:[#allocation7 + $0x10] sm:$0xf]
    %v168 = vld [vmem:[#allocation7 + $0x14] sm:$0xff]
    %v169 = vld [vmem:[#allocation7 + $0x1c] sm:$0xff]
    %v170 = vld [vmem:[#allocation7 + $0x24] sm:$0xf]
    %v171 = vld [vmem:[%s0] sm:$0xff]
    %v172 = vld [vmem:[%s0 + $0x8] sm:$0xff]
    %v173 = vld [vmem:[%s0 + $0x10] sm:$0xff]
    %v174 = vld [vmem:[%s0 + $0x18] sm:$0xff]
    %v175 = vld [vmem:[%s0 + $0x20] sm:$0xff]
    %v176 = vld [vmem:[%s0 + $0x28] sm:$0xff]
    %v177 = vld [vmem:[%s0 + $0x30] sm:$0xff]
    %v178 = vld [vmem:[%s0 + $0x38] sm:$0xff]
    %v179 = vld [vmem:[%s0 + $0x40] sm:$0xff]
    %v180 = vld [vmem:[%s0 + $0x48] sm:$0xff]
    %v181 = vld [vmem:[%s0 + $0x50] sm:$0xff]
    %v182 = vld [vmem:[%s0 + $0x58] sm:$0xff]
    %v183 = vld [vmem:[%s0 + $0x60] sm:$0xff]
    %v184 = vld [vmem:[%s0 + $0x68] sm:$0xff]
    %v185 = vld [vmem:[%s0 + $0x70] sm:$0xff]
    %v186 = vld [vmem:[%s0 + $0x78] sm:$0xff]
    %v187 = vld [vmem:[%s0 + $0x80] sm:$0xff]
    %v188 = vld [vmem:[%s0 + $0x88] sm:$0xff]
    %v189 = vld [vmem:[%s0 + $0x90] sm:$0xff]
    %v190 = vld [vmem:[%s0 + $0x98] sm:$0xff]
    %v191 = vld [vmem:[%s0 + $0xa0] sm:$0xff]
    %v192 = vld [vmem:[%s0 + $0xa8] sm:$0xff]
    %v193 = vld [vmem:[%s0 + $0xb0] sm:$0xff]
    %v194 = vld [vmem:[%s0 + $0xb8] sm:$0xff]
    %v195 = vld [vmem:[%s0 + $0xc0] sm:$0xff]
    %v196 = vld [vmem:[%s0 + $0xc8] sm:$0xff]
    %v197 = vld [vmem:[%s0 + $0xd0] sm:$0xff]
    %v198 = vld [vmem:[%s0 + $0xd8] sm:$0xff]
    %v199 = vld [vmem:[%s0 + $0xe0] sm:$0xff]
    %v200 = vld [vmem:[%s0 + $0xe8] sm:$0xff]
    %v201 = vld [vmem:[%s0 + $0xf0] sm:$0xff]
    %v202 = vld [vmem:[%s0 + $0xf8] sm:$0xff]
    %v203 = vld [vmem:[%s0 + $0x100] sm:$0xff]
    %v204 = vld [vmem:[%s0 + $0x108] sm:$0xff]
    %v205 = vld [vmem:[%s0 + $0x110] sm:$0xff]
    %v206 = vld [vmem:[%s0 + $0x118] sm:$0xff]
    %v207 = vld [vmem:[%s0 + $0x120] sm:$0xff]
    %v208 = vld [vmem:[%s0 + $0x128] sm:$0xff]
    %v209 = vld [vmem:[%s0 + $0x130] sm:$0xff]
    %v210 = vld [vmem:[%s0 + $0x138] sm:$0xff]
    %v211 = vld [vmem:[%s0 + $0x140] sm:$0xff]
    %v212 = vld [vmem:[%s0 + $0x148] sm:$0xff]
    %v213 = vld [vmem:[%s0 + $0x150] sm:$0xff]
    %v214 = vld [vmem:[%s0 + $0x158] sm:$0xff]
    %v215 = vld [vmem:[%s0 + $0x160] sm:$0xff]
    %v216 = vld [vmem:[%s0 + $0x168] sm:$0xff]
    %v217 = vld [vmem:[%s0 + $0x170] sm:$0xff]
    %v218 = vld [vmem:[%s0 + $0x178] sm:$0xff]
    %v219 = vld [vmem:[%s0 + $0x180] sm:$0xff]
    %v220 = vld [vmem:[%s0 + $0x188] sm:$0xff]
    %v221 = vld [vmem:[%s0 + $0x190] sm:$0xff]
    %v222 = vld [vmem:[%s0 + $0x198] sm:$0xff]
    %v223 = vld [vmem:[%s0 + $0x1a0] sm:$0xff]
    %v224 = vld [vmem:[%s0 + $0x1a8] sm:$0xff]
    %v225 = vld [vmem:[%s0 + $0x1b0] sm:$0xff]
    %v226 = vld [vmem:[%s0 + $0x1b8] sm:$0xff]
    %v227 = vld [vmem:[%s0 + $0x1c0] sm:$0xff]
    %v228 = vld [vmem:[%s0 + $0x1c8] sm:$0xff]
    %v229 = vld [vmem:[%s0 + $0x1d0] sm:$0xff]
    %v230 = vld [vmem:[%s0 + $0x1d8] sm:$0xff]
    %v231 = vld [vmem:[%s0 + $0x1e0] sm:$0xff]
    %v232 = vld [vmem:[%s0 + $0x1e8] sm:$0xff]
    %v233 = vld [vmem:[%s0 + $0x1f0] sm:$0xff]
    %v234 = vld [vmem:[%s0 + $0x1f8] sm:$0xff]
    %v235 = vld [vmem:[%s0 + $0x200] sm:$0xff]
    %v236 = vld [vmem:[%s0 + $0x208] sm:$0xff]
    %v237 = vld [vmem:[%s0 + $0x210] sm:$0xff]
    %v238 = vld [vmem:[%s0 + $0x218] sm:$0xff]
    %v239 = vld [vmem:[%s0 + $0x220] sm:$0xff]
    %v240 = vld [vmem:[%s0 + $0x228] sm:$0xff]
    %v241 = vld [vmem:[%s0 + $0x230] sm:$0xff]
    %v242 = vld [vmem:[%s0 + $0x238] sm:$0xff]
    %v243 = vld [vmem:[%s0 + $0x240] sm:$0xff]
    %v244 = vld [vmem:[%s0 + $0x248] sm:$0xff]
    %v245 = vld [vmem:[%s0 + $0x250] sm:$0xff]
    %v246 = vld [vmem:[%s0 + $0x258] sm:$0xff]
    %v247 = vld [vmem:[%s0 + $0x260] sm:$0xff]
    %v248 = vld [vmem:[%s0 + $0x268] sm:$0xff]
    %v249 = vld [vmem:[%s0 + $0x270] sm:$0xff]
    %v250 = vld [vmem:[%s0 + $0x278] sm:$0xff]
    %v251 = vld [vmem:[%s1] sm:$0x3]
    %v253 = vlaneseq
    %v254 = vshrl.u32 %v253, 7
    %v255 = vsub.s32 0, %v254
    %v256 = vrot.slane %v251, %v255
    %v257 = vlaneseq
    %v258 = vshrl.u32 %v257, 7
    %v259 = vsub.s32 1, %v258
    %v260 = vrot.slane %v251, %v259
    %v269 = vunpack.c.l.b16 %v165
    %v270 = vunpack.c.h.b16 %v165
    %v271 = vunpack.c.l.b16 %v166
    %v272 = vunpack.c.h.b16 %v166
    %v273 = vunpack.c.l.b16 %v167
    %v274 = vunpack.c.l.b16 %v168
    %v275 = vunpack.c.h.b16 %v168
    %v276 = vunpack.c.l.b16 %v169
    %v277 = vunpack.c.h.b16 %v169
    %v278 = vunpack.c.l.b16 %v170
    %v279 = vpack.c.b16 %v274, %v269
    %v280 = vpack.c.b16 %v275, %v270
    %v281 = vpack.c.b16 %v276, %v271
    %v282 = vpack.c.b16 %v277, %v272
    %v283 = vpack.c.b16 %v278, %v273
    %v369 = vunpack.c.l.b16 %v171
    %v370 = vunpack.c.h.b16 %v171
    %v371 = vunpack.c.l.b16 %v172
    %v372 = vunpack.c.h.b16 %v172
    %v373 = vunpack.c.l.b16 %v173
    %v374 = vunpack.c.h.b16 %v173
    %v375 = vunpack.c.l.b16 %v174
    %v376 = vunpack.c.h.b16 %v174
    %v377 = vunpack.c.l.b16 %v175
    %v378 = vunpack.c.h.b16 %v175
    %v379 = vunpack.c.l.b16 %v176
    %v380 = vunpack.c.h.b16 %v176
    %v381 = vunpack.c.l.b16 %v177
    %v382 = vunpack.c.h.b16 %v177
    %v383 = vunpack.c.l.b16 %v178
    %v384 = vunpack.c.h.b16 %v178
    %v385 = vunpack.c.l.b16 %v179
    %v386 = vunpack.c.h.b16 %v179
    %v387 = vunpack.c.l.b16 %v180
    %v388 = vunpack.c.h.b16 %v180
    %v389 = vunpack.c.l.b16 %v181
    %v390 = vunpack.c.h.b16 %v181
    %v391 = vunpack.c.l.b16 %v182
    %v392 = vunpack.c.h.b16 %v182
    %v393 = vunpack.c.l.b16 %v183
    %v394 = vunpack.c.h.b16 %v183
    %v395 = vunpack.c.l.b16 %v184
    %v396 = vunpack.c.h.b16 %v184
    %v397 = vunpack.c.l.b16 %v185
    %v398 = vunpack.c.h.b16 %v185
    %v399 = vunpack.c.l.b16 %v186
    %v400 = vunpack.c.h.b16 %v186
    %v401 = vunpack.c.l.b16 %v187
    %v402 = vunpack.c.h.b16 %v187
    %v403 = vunpack.c.l.b16 %v188
    %v404 = vunpack.c.h.b16 %v188
    %v405 = vunpack.c.l.b16 %v189
    %v406 = vunpack.c.h.b16 %v189
    %v407 = vunpack.c.l.b16 %v190
    %v408 = vunpack.c.h.b16 %v190
    %v409 = vunpack.c.l.b16 %v191
    %v410 = vunpack.c.h.b16 %v191
    %v411 = vunpack.c.l.b16 %v192
    %v412 = vunpack.c.h.b16 %v192
    %v413 = vunpack.c.l.b16 %v193
    %v414 = vunpack.c.h.b16 %v193
    %v415 = vunpack.c.l.b16 %v194
    %v416 = vunpack.c.h.b16 %v194
    %v417 = vunpack.c.l.b16 %v195
    %v418 = vunpack.c.h.b16 %v195
    %v419 = vunpack.c.l.b16 %v196
    %v420 = vunpack.c.h.b16 %v196
    %v421 = vunpack.c.l.b16 %v197
    %v422 = vunpack.c.h.b16 %v197
    %v423 = vunpack.c.l.b16 %v198
    %v424 = vunpack.c.h.b16 %v198
    %v425 = vunpack.c.l.b16 %v199
    %v426 = vunpack.c.h.b16 %v199
    %v427 = vunpack.c.l.b16 %v200
    %v428 = vunpack.c.h.b16 %v200
    %v429 = vunpack.c.l.b16 %v201
    %v430 = vunpack.c.h.b16 %v201
    %v431 = vunpack.c.l.b16 %v202
    %v432 = vunpack.c.h.b16 %v202
    %v433 = vunpack.c.l.b16 %v203
    %v434 = vunpack.c.h.b16 %v203
    %v435 = vunpack.c.l.b16 %v204
    %v436 = vunpack.c.h.b16 %v204
    %v437 = vunpack.c.l.b16 %v205
    %v438 = vunpack.c.h.b16 %v205
    %v439 = vunpack.c.l.b16 %v206
    %v440 = vunpack.c.h.b16 %v206
    %v441 = vunpack.c.l.b16 %v207
    %v442 = vunpack.c.h.b16 %v207
    %v443 = vunpack.c.l.b16 %v208
    %v444 = vunpack.c.h.b16 %v208
    %v445 = vunpack.c.l.b16 %v209
    %v446 = vunpack.c.h.b16 %v209
    %v447 = vunpack.c.l.b16 %v210
    %v448 = vunpack.c.h.b16 %v210
    %v449 = vunpack.c.l.b16 %v211
    %v450 = vunpack.c.h.b16 %v211
    %v451 = vunpack.c.l.b16 %v212
    %v452 = vunpack.c.h.b16 %v212
    %v453 = vunpack.c.l.b16 %v213
    %v454 = vunpack.c.h.b16 %v213
    %v455 = vunpack.c.l.b16 %v214
    %v456 = vunpack.c.h.b16 %v214
    %v457 = vunpack.c.l.b16 %v215
    %v458 = vunpack.c.h.b16 %v215
    %v459 = vunpack.c.l.b16 %v216
    %v460 = vunpack.c.h.b16 %v216
    %v461 = vunpack.c.l.b16 %v217
    %v462 = vunpack.c.h.b16 %v217
    %v463 = vunpack.c.l.b16 %v218
    %v464 = vunpack.c.h.b16 %v218
    %v465 = vunpack.c.l.b16 %v219
    %v466 = vunpack.c.h.b16 %v219
    %v467 = vunpack.c.l.b16 %v220
    %v468 = vunpack.c.h.b16 %v220
    %v469 = vunpack.c.l.b16 %v221
    %v470 = vunpack.c.h.b16 %v221
    %v471 = vunpack.c.l.b16 %v222
    %v472 = vunpack.c.h.b16 %v222
    %v473 = vunpack.c.l.b16 %v223
    %v474 = vunpack.c.h.b16 %v223
    %v475 = vunpack.c.l.b16 %v224
    %v476 = vunpack.c.h.b16 %v224
    %v477 = vunpack.c.l.b16 %v225
    %v478 = vunpack.c.h.b16 %v225
    %v479 = vunpack.c.l.b16 %v226
    %v480 = vunpack.c.h.b16 %v226
    %v481 = vunpack.c.l.b16 %v227
    %v482 = vunpack.c.h.b16 %v227
    %v483 = vunpack.c.l.b16 %v228
    %v484 = vunpack.c.h.b16 %v228
    %v485 = vunpack.c.l.b16 %v229
    %v486 = vunpack.c.h.b16 %v229
    %v487 = vunpack.c.l.b16 %v230
    %v488 = vunpack.c.h.b16 %v230
    %v489 = vunpack.c.l.b16 %v231
    %v490 = vunpack.c.h.b16 %v231
    %v491 = vunpack.c.l.b16 %v232
    %v492 = vunpack.c.h.b16 %v232
    %v493 = vunpack.c.l.b16 %v233
    %v494 = vunpack.c.h.b16 %v233
    %v495 = vunpack.c.l.b16 %v234
    %v496 = vunpack.c.h.b16 %v234
    %v497 = vunpack.c.l.b16 %v235
    %v498 = vunpack.c.h.b16 %v235
    %v499 = vunpack.c.l.b16 %v236
    %v500 = vunpack.c.h.b16 %v236
    %v501 = vunpack.c.l.b16 %v237
    %v502 = vunpack.c.h.b16 %v237
    %v503 = vunpack.c.l.b16 %v238
    %v504 = vunpack.c.h.b16 %v238
    %v505 = vunpack.c.l.b16 %v239
    %v506 = vunpack.c.h.b16 %v239
    %v507 = vunpack.c.l.b16 %v240
    %v508 = vunpack.c.h.b16 %v240
    %v509 = vunpack.c.l.b16 %v241
    %v510 = vunpack.c.h.b16 %v241
    %v511 = vunpack.c.l.b16 %v242
    %v512 = vunpack.c.h.b16 %v242
    %v513 = vunpack.c.l.b16 %v243
    %v514 = vunpack.c.h.b16 %v243
    %v515 = vunpack.c.l.b16 %v244
    %v516 = vunpack.c.h.b16 %v244
    %v517 = vunpack.c.l.b16 %v245
    %v518 = vunpack.c.h.b16 %v245
    %v519 = vunpack.c.l.b16 %v246
    %v520 = vunpack.c.h.b16 %v246
    %v521 = vunpack.c.l.b16 %v247
    %v522 = vunpack.c.h.b16 %v247
    %v523 = vunpack.c.l.b16 %v248
    %v524 = vunpack.c.h.b16 %v248
    %v525 = vunpack.c.l.b16 %v249
    %v526 = vunpack.c.h.b16 %v249
    %v527 = vunpack.c.l.b16 %v250
    %v528 = vunpack.c.h.b16 %v250
    %v529 = vpack.c.b16 %v371, %v369
    %v530 = vpack.c.b16 %v372, %v370
    %v531 = vpack.c.b16 %v375, %v373
    %v532 = vpack.c.b16 %v376, %v374
    %v533 = vpack.c.b16 %v379, %v377
    %v534 = vpack.c.b16 %v380, %v378
    %v535 = vpack.c.b16 %v383, %v381
    %v536 = vpack.c.b16 %v384, %v382
    %v537 = vpack.c.b16 %v387, %v385
    %v538 = vpack.c.b16 %v388, %v386
    %v539 = vpack.c.b16 %v391, %v389
    %v540 = vpack.c.b16 %v392, %v390
    %v541 = vpack.c.b16 %v395, %v393
    %v542 = vpack.c.b16 %v396, %v394
    %v543 = vpack.c.b16 %v399, %v397
    %v544 = vpack.c.b16 %v400, %v398
    %v545 = vpack.c.b16 %v403, %v401
    %v546 = vpack.c.b16 %v404, %v402
    %v547 = vpack.c.b16 %v407, %v405
    %v548 = vpack.c.b16 %v408, %v406
    %v549 = vpack.c.b16 %v411, %v409
    %v550 = vpack.c.b16 %v412, %v410
    %v551 = vpack.c.b16 %v415, %v413
    %v552 = vpack.c.b16 %v416, %v414
    %v553 = vpack.c.b16 %v419, %v417
    %v554 = vpack.c.b16 %v420, %v418
    %v555 = vpack.c.b16 %v423, %v421
    %v556 = vpack.c.b16 %v424, %v422
    %v557 = vpack.c.b16 %v427, %v425
    %v558 = vpack.c.b16 %v428, %v426
    %v559 = vpack.c.b16 %v431, %v429
    %v560 = vpack.c.b16 %v432, %v430
    %v561 = vpack.c.b16 %v435, %v433
    %v562 = vpack.c.b16 %v436, %v434
    %v563 = vpack.c.b16 %v439, %v437
    %v564 = vpack.c.b16 %v440, %v438
    %v565 = vpack.c.b16 %v443, %v441
    %v566 = vpack.c.b16 %v444, %v442
    %v567 = vpack.c.b16 %v447, %v445
    %v568 = vpack.c.b16 %v448, %v446
    %v569 = vpack.c.b16 %v451, %v449
    %v570 = vpack.c.b16 %v452, %v450
    %v571 = vpack.c.b16 %v455, %v453
    %v572 = vpack.c.b16 %v456, %v454
    %v573 = vpack.c.b16 %v459, %v457
    %v574 = vpack.c.b16 %v460, %v458
    %v575 = vpack.c.b16 %v463, %v461
    %v576 = vpack.c.b16 %v464, %v462
    %v577 = vpack.c.b16 %v467, %v465
    %v578 = vpack.c.b16 %v468, %v466
    %v579 = vpack.c.b16 %v471, %v469
    %v580 = vpack.c.b16 %v472, %v470
    %v581 = vpack.c.b16 %v475, %v473
    %v582 = vpack.c.b16 %v476, %v474
    %v583 = vpack.c.b16 %v479, %v477
    %v584 = vpack.c.b16 %v480, %v478
    %v585 = vpack.c.b16 %v483, %v481
    %v586 = vpack.c.b16 %v484, %v482
    %v587 = vpack.c.b16 %v487, %v485
    %v588 = vpack.c.b16 %v488, %v486
    %v589 = vpack.c.b16 %v491, %v489
    %v590 = vpack.c.b16 %v492, %v490
    %v591 = vpack.c.b16 %v495, %v493
    %v592 = vpack.c.b16 %v496, %v494
    %v593 = vpack.c.b16 %v499, %v497
    %v594 = vpack.c.b16 %v500, %v498
    %v595 = vpack.c.b16 %v503, %v501
    %v596 = vpack.c.b16 %v504, %v502
    %v597 = vpack.c.b16 %v507, %v505
    %v598 = vpack.c.b16 %v508, %v506
    %v599 = vpack.c.b16 %v511, %v509
    %v600 = vpack.c.b16 %v512, %v510
    %v601 = vpack.c.b16 %v515, %v513
    %v602 = vpack.c.b16 %v516, %v514
    %v603 = vpack.c.b16 %v519, %v517
    %v604 = vpack.c.b16 %v520, %v518
    %v605 = vpack.c.b16 %v523, %v521
    %v606 = vpack.c.b16 %v524, %v522
    %v607 = vpack.c.b16 %v527, %v525
    %v608 = vpack.c.b16 %v528, %v526
    %689 = vmatprep.subr.bf16.mxu0 %v544
    %690 = vmatpush1.bf16.msra.mxu0 %v543
    %691 = vmatprep.subr.bf16.mxu0 %v542
    %692 = vmatpush1.bf16.msra.mxu0 %v541
    %693 = vmatprep.subr.bf16.mxu0 %v540
    %694 = vmatpush1.bf16.msra.mxu0 %v539
    %695 = vmatprep.subr.bf16.mxu0 %v538
    %696 = vmatpush1.bf16.msra.mxu0 %v537
    %697 = vmatprep.subr.bf16.mxu0 %v536
    %698 = vmatpush1.bf16.msra.mxu0 %v535
    %699 = vmatprep.subr.bf16.mxu0 %v534
    %700 = vmatpush1.bf16.msra.mxu0 %v533
    %701 = vmatprep.subr.bf16.mxu0 %v532
    %702 = vmatpush1.bf16.msra.mxu0 %v531
    %703 = vmatprep.subr.bf16.mxu0 %v530
    %704 = vmatpush1.bf16.msra.mxu0 %v529
    %705 = vmatprep.subr.bf16.mxu0 %v560
    %706 = vmatpush2.bf16.msra.mxu0 %v559
    %707 = vmatprep.subr.bf16.mxu0 %v558
    %708 = vmatpush2.bf16.msra.mxu0 %v557
    %709 = vmatprep.subr.bf16.mxu0 %v556
    %710 = vmatpush2.bf16.msra.mxu0 %v555
    %711 = vmatprep.subr.bf16.mxu0 %v554
    %712 = vmatpush2.bf16.msra.mxu0 %v553
    %713 = vmatprep.subr.bf16.mxu0 %v552
    %714 = vmatpush2.bf16.msra.mxu0 %v551
    %715 = vmatprep.subr.bf16.mxu0 %v550
    %716 = vmatpush2.bf16.msra.mxu0 %v549
    %717 = vmatprep.subr.bf16.mxu0 %v548
    %718 = vmatpush2.bf16.msra.mxu0 %v547
    %719 = vmatprep.subr.bf16.mxu0 %v546
    %720 = vmatpush2.bf16.msra.mxu0 %v545
    %721 = vmatprep.mubr.bf16.mxu0 %v280
    %722 = vmatmul.mubr.bf16.gmra.mxu0 %v279
    %v723 = vpop.f32.mrf.mxu0
    %v724 = vadd.f32 %v256, %v723
    %v725 = vpop.f32.mrf.mxu0
    %v726 = vadd.f32 %v260, %v725
    %v727 = vpop.f32.mrf.mxu0
    %v728 = vadd.f32 %v256, %v727
    %v729 = vpop.f32.mrf.mxu0
    %v730 = vadd.f32 %v260, %v729
    %731 = vdwg.mxu0
    %732 = vmatprep.subr.bf16.mxu0 %v576
    %733 = vmatpush1.bf16.msra.mxu0 %v575
    %734 = vmatprep.subr.bf16.mxu0 %v574
    %735 = vmatpush1.bf16.msra.mxu0 %v573
    %736 = vmatprep.subr.bf16.mxu0 %v572
    %737 = vmatpush1.bf16.msra.mxu0 %v571
    %738 = vmatprep.subr.bf16.mxu0 %v570
    %739 = vmatpush1.bf16.msra.mxu0 %v569
    %740 = vmatprep.subr.bf16.mxu0 %v568
    %741 = vmatpush1.bf16.msra.mxu0 %v567
    %742 = vmatprep.subr.bf16.mxu0 %v566
    %743 = vmatpush1.bf16.msra.mxu0 %v565
    %744 = vmatprep.subr.bf16.mxu0 %v564
    %745 = vmatpush1.bf16.msra.mxu0 %v563
    %746 = vmatprep.subr.bf16.mxu0 %v562
    %747 = vmatpush1.bf16.msra.mxu0 %v561
    %748 = vmatprep.subr.bf16.mxu0 %v592
    %749 = vmatpush2.bf16.msra.mxu0 %v591
    %750 = vmatprep.subr.bf16.mxu0 %v590
    %751 = vmatpush2.bf16.msra.mxu0 %v589
    %752 = vmatprep.subr.bf16.mxu0 %v588
    %753 = vmatpush2.bf16.msra.mxu0 %v587
    %754 = vmatprep.subr.bf16.mxu0 %v586
    %755 = vmatpush2.bf16.msra.mxu0 %v585
    %756 = vmatprep.subr.bf16.mxu0 %v584
    %757 = vmatpush2.bf16.msra.mxu0 %v583
    %758 = vmatprep.subr.bf16.mxu0 %v582
    %759 = vmatpush2.bf16.msra.mxu0 %v581
    %760 = vmatprep.subr.bf16.mxu0 %v580
    %761 = vmatpush2.bf16.msra.mxu0 %v579
    %762 = vmatprep.subr.bf16.mxu0 %v578
    %763 = vmatpush2.bf16.msra.mxu0 %v577
    %764 = vmatprep.mubr.bf16.mxu0 %v282
    %765 = vmatmul.mubr.bf16.gmra.mxu0 %v281
    %v766 = vpop.f32.mrf.mxu0
    %v767 = vadd.f32 %v724, %v766
    %v768 = vpop.f32.mrf.mxu0
    %v769 = vadd.f32 %v726, %v768
    %v770 = vpop.f32.mrf.mxu0
    %v771 = vadd.f32 %v728, %v770
    %v772 = vpop.f32.mrf.mxu0
    %v773 = vadd.f32 %v730, %v772
    %774 = vdwg.mxu0
    %775 = vmatprep.subr.bf16.mxu0 %v608
    %776 = vmatpush1.bf16.msra.mxu0 %v607
    %777 = vmatprep.subr.bf16.mxu0 %v606
    %778 = vmatpush1.bf16.msra.mxu0 %v605
    %779 = vmatprep.subr.bf16.mxu0 %v604
    %780 = vmatpush1.bf16.msra.mxu0 %v603
    %781 = vmatprep.subr.bf16.mxu0 %v602
    %782 = vmatpush1.bf16.msra.mxu0 %v601
    %783 = vmatprep.subr.bf16.mxu0 %v600
    %784 = vmatpush1.bf16.msra.mxu0 %v599
    %785 = vmatprep.subr.bf16.mxu0 %v598
    %786 = vmatpush1.bf16.msra.mxu0 %v597
    %787 = vmatprep.subr.bf16.mxu0 %v596
    %788 = vmatpush1.bf16.msra.mxu0 %v595
    %789 = vmatprep.subr.bf16.mxu0 %v594
    %790 = vmatpush1.bf16.msra.mxu0 %v593
    %791 = vmatprep.subr.bf16.mxu0 0
    %792 = vmatpush2.bf16.msra.mxu0 0
    %793 = vmatprep.subr.bf16.mxu0 0
    %794 = vmatpush2.bf16.msra.mxu0 0
    %795 = vmatprep.subr.bf16.mxu0 0
    %796 = vmatpush2.bf16.msra.mxu0 0
    %797 = vmatprep.subr.bf16.mxu0 0
    %798 = vmatpush2.bf16.msra.mxu0 0
    %799 = vmatprep.subr.bf16.mxu0 0
    %800 = vmatpush2.bf16.msra.mxu0 0
    %801 = vmatprep.subr.bf16.mxu0 0
    %802 = vmatpush2.bf16.msra.mxu0 0
    %803 = vmatprep.subr.bf16.mxu0 0
    %804 = vmatpush2.bf16.msra.mxu0 0
    %805 = vmatprep.subr.bf16.mxu0 0
    %806 = vmatpush2.bf16.msra.mxu0 0
    %807 = vmatprep.mubr.bf16.mxu0 0
    %808 = vmatmul.mubr.bf16.gmra.mxu0 %v283
    %v809 = vpop.f32.mrf.mxu0
    %v810 = vadd.f32 %v767, %v809
    %v811 = vpop.f32.mrf.mxu0
    %v812 = vadd.f32 %v769, %v811
    %v813 = vpop.f32.mrf.mxu0
    %v814 = vadd.f32 %v771, %v813
    %v815 = vpop.f32.mrf.mxu0
    %v816 = vadd.f32 %v773, %v815
    %817 = vdwg.mxu0
    %v818 = vmax.f32 %v810, 0.0
    %v819 = vmax.f32 %v812, 0.0
    %v820 = vmax.f32 %v814, 0.0
    %v821 = vmax.f32 %v816, 0.0
    %v822 = vpack.c.bf16 %v820, %v818
    %v823 = vpack.c.bf16 %v821, %v819
    %v824 = vld [vmem:[%s2] sm:$0xf]
    %v825 = vld [vmem:[%s2 + $0x4] sm:$0xf]
    %v826 = vld [vmem:[%s2 + $0x8] sm:$0xf]
    %v827 = vld [vmem:[%s2 + $0xc] sm:$0xf]
    %v828 = vld [vmem:[%s2 + $0x10] sm:$0xf]
    %v829 = vld [vmem:[%s2 + $0x14] sm:$0xf]
    %v830 = vld [vmem:[%s2 + $0x18] sm:$0xf]
    %v831 = vld [vmem:[%s2 + $0x1c] sm:$0xf]
    %v832 = vld [vmem:[%s2 + $0x20] sm:$0xf]
    %v833 = vld [vmem:[%s2 + $0x24] sm:$0xf]
    %v834 = vld [vmem:[%s2 + $0x28] sm:$0xf]
    %v835 = vld [vmem:[%s2 + $0x2c] sm:$0xf]
    %v836 = vld [vmem:[%s2 + $0x30] sm:$0xf]
    %v837 = vld [vmem:[%s2 + $0x34] sm:$0xf]
    %v838 = vld [vmem:[%s2 + $0x38] sm:$0xf]
    %v839 = vld [vmem:[%s2 + $0x3c] sm:$0xf]
    %v840 = vld [vmem:[%s2 + $0x40] sm:$0xf]
    %v841 = vld [vmem:[%s2 + $0x44] sm:$0xf]
    %v842 = vld [vmem:[%s2 + $0x48] sm:$0xf]
    %v843 = vld [vmem:[%s2 + $0x4c] sm:$0xf]
    %v844 = vld [vmem:[%s2 + $0x50] sm:$0xf]
    %v845 = vld [vmem:[%s2 + $0x54] sm:$0xf]
    %v846 = vld [vmem:[%s2 + $0x58] sm:$0xf]
    %v847 = vld [vmem:[%s2 + $0x5c] sm:$0xf]
    %v848 = vld [vmem:[%s2 + $0x60] sm:$0xf]
    %v849 = vld [vmem:[%s2 + $0x64] sm:$0xf]
    %v850 = vld [vmem:[%s2 + $0x68] sm:$0xf]
    %v851 = vld [vmem:[%s2 + $0x6c] sm:$0xf]
    %v852 = vld [vmem:[%s2 + $0x70] sm:$0xf]
    %v853 = vld [vmem:[%s2 + $0x74] sm:$0xf]
    %v854 = vld [vmem:[%s2 + $0x78] sm:$0xf]
    %v855 = vld [vmem:[%s2 + $0x7c] sm:$0xf]
    %v856 = vld [vmem:[%s3] sm:$0x1]
    %v858 = vlaneseq
    %v859 = vshrl.u32 %v858, 7
    %v860 = vsub.s32 0, %v859
    %v861 = vrot.slane %v856, %v860
    %v895 = vunpack.c.l.b16 %v824
    %v896 = vunpack.c.l.b16 %v825
    %v897 = vunpack.c.l.b16 %v826
    %v898 = vunpack.c.l.b16 %v827
    %v899 = vunpack.c.l.b16 %v828
    %v900 = vunpack.c.l.b16 %v829
    %v901 = vunpack.c.l.b16 %v830
    %v902 = vunpack.c.l.b16 %v831
    %v903 = vunpack.c.l.b16 %v832
    %v904 = vunpack.c.l.b16 %v833
    %v905 = vunpack.c.l.b16 %v834
    %v906 = vunpack.c.l.b16 %v835
    %v907 = vunpack.c.l.b16 %v836
    %v908 = vunpack.c.l.b16 %v837
    %v909 = vunpack.c.l.b16 %v838
    %v910 = vunpack.c.l.b16 %v839
    %v911 = vunpack.c.l.b16 %v840
    %v912 = vunpack.c.l.b16 %v841
    %v913 = vunpack.c.l.b16 %v842
    %v914 = vunpack.c.l.b16 %v843
    %v915 = vunpack.c.l.b16 %v844
    %v916 = vunpack.c.l.b16 %v845
    %v917 = vunpack.c.l.b16 %v846
    %v918 = vunpack.c.l.b16 %v847
    %v919 = vunpack.c.l.b16 %v848
    %v920 = vunpack.c.l.b16 %v849
    %v921 = vunpack.c.l.b16 %v850
    %v922 = vunpack.c.l.b16 %v851
    %v923 = vunpack.c.l.b16 %v852
    %v924 = vunpack.c.l.b16 %v853
    %v925 = vunpack.c.l.b16 %v854
    %v926 = vunpack.c.l.b16 %v855
    %v927 = vpack.c.b16 %v896, %v895
    %v928 = vpack.c.b16 %v898, %v897
    %v929 = vpack.c.b16 %v900, %v899
    %v930 = vpack.c.b16 %v902, %v901
    %v931 = vpack.c.b16 %v904, %v903
    %v932 = vpack.c.b16 %v906, %v905
    %v933 = vpack.c.b16 %v908, %v907
    %v934 = vpack.c.b16 %v910, %v909
    %v935 = vpack.c.b16 %v912, %v911
    %v936 = vpack.c.b16 %v914, %v913
    %v937 = vpack.c.b16 %v916, %v915
    %v938 = vpack.c.b16 %v918, %v917
    %v939 = vpack.c.b16 %v920, %v919
    %v940 = vpack.c.b16 %v922, %v921
    %v941 = vpack.c.b16 %v924, %v923
    %v942 = vpack.c.b16 %v926, %v925
    %959 = vmatprep.subr.bf16.mxu0 0
    %960 = vmatpush1.bf16.msra.mxu0 %v934
    %961 = vmatprep.subr.bf16.mxu0 0
    %962 = vmatpush1.bf16.msra.mxu0 %v933
    %963 = vmatprep.subr.bf16.mxu0 0
    %964 = vmatpush1.bf16.msra.mxu0 %v932
    %965 = vmatprep.subr.bf16.mxu0 0
    %966 = vmatpush1.bf16.msra.mxu0 %v931
    %967 = vmatprep.subr.bf16.mxu0 0
    %968 = vmatpush1.bf16.msra.mxu0 %v930
    %969 = vmatprep.subr.bf16.mxu0 0
    %970 = vmatpush1.bf16.msra.mxu0 %v929
    %971 = vmatprep.subr.bf16.mxu0 0
    %972 = vmatpush1.bf16.msra.mxu0 %v928
    %973 = vmatprep.subr.bf16.mxu0 0
    %974 = vmatpush1.bf16.msra.mxu0 %v927
    %975 = vmatprep.subr.bf16.mxu0 0
    %976 = vmatpush2.bf16.msra.mxu0 %v942
    %977 = vmatprep.subr.bf16.mxu0 0
    %978 = vmatpush2.bf16.msra.mxu0 %v941
    %979 = vmatprep.subr.bf16.mxu0 0
    %980 = vmatpush2.bf16.msra.mxu0 %v940
    %981 = vmatprep.subr.bf16.mxu0 0
    %982 = vmatpush2.bf16.msra.mxu0 %v939
    %983 = vmatprep.subr.bf16.mxu0 0
    %984 = vmatpush2.bf16.msra.mxu0 %v938
    %985 = vmatprep.subr.bf16.mxu0 0
    %986 = vmatpush2.bf16.msra.mxu0 %v937
    %987 = vmatprep.subr.bf16.mxu0 0
    %988 = vmatpush2.bf16.msra.mxu0 %v936
    %989 = vmatprep.subr.bf16.mxu0 0
    %990 = vmatpush2.bf16.msra.mxu0 %v935
    %991 = vmatprep.mubr.bf16.mxu0 %v823
    %992 = vmatmul.mubr.bf16.gmra.mxu0 %v822
    %v993 = vpop.f32.mrf.mxu0
    %v994 = vadd.f32 %v861, %v993
    %v995 = vpop.f32.mrf.mxu0
    %v996 = vpop.f32.mrf.mxu0
    %v997 = vadd.f32 %v861, %v996
    %v998 = vpop.f32.mrf.mxu0
    %999 = vdwg.mxu0
    %v1000 = vmax.f32 %v994, 0.0
    %v1001 = vmax.f32 %v997, 0.0
    %1002 = vst [vmem:[%s6] sm:$0xff] %v1000
    %1003 = vst [vmem:[%s6 + $0x8] sm:$0xff] %v1001
    // Predicated region
    $region22: #{facegrid_forward.2} parent=1 // pred_check
      _
    $region23: #{facegrid_forward.2} parent=1 // pred_check_branch
      %1005 = sbr.rel (0) target = $region25
    $region24: #{facegrid_forward.2} parent=1 // pred_region
      _
    $region25: #{facegrid_forward.2} parent=1 // pred_fallthru
      _
    // Predicated region
    $region26: #{facegrid_forward.2} parent=1 // pred_check
      _
    $region27: #{facegrid_forward.2} parent=1 // pred_check_branch
      %1007 = sbr.rel (0) target = $region29
    $region28: #{facegrid_forward.2} parent=1 // pred_region
      _
    $region29: #{facegrid_forward.2} parent=1 // pred_fallthru
      _

</llo_original>
